<compile_context>
chip_gen: v5e
topology: v5e:2x2
jax: 0.10.0
libtpu: 0.0.40
codegen_flags: <defaults>
</compile_context>

<pallas_src>
import numpy as np
import jax
import jax.numpy as jnp
from jax.experimental import pallas as pl
from jax.experimental.pallas import tpu as pltpu


# ----------------------------------------------------------------------------
# Deterministic parameter setup (glue): librosa-style mel filterbank (HTK, no norm)
# ----------------------------------------------------------------------------
def _hz_to_mel_htk(f):
    return 2595.0 * np.log10(1.0 + np.asarray(f, dtype=np.float64) / 700.0)


def _mel_to_hz_htk(m):
    return 700.0 * (10.0 ** (np.asarray(m, dtype=np.float64) / 2595.0) - 1.0)


def librosa_mel_fb(sr, n_fft, n_mels, fmin, fmax, norm=None):
    """Equivalent of librosa.filters.mel(..., htk=True).T -> (n_freqs, n_mels)."""
    n_freqs = 1 + n_fft // 2
    fftfreqs = np.linspace(0.0, sr / 2.0, n_freqs, dtype=np.float64)

    min_mel = _hz_to_mel_htk(fmin)
    max_mel = _hz_to_mel_htk(fmax)
    mels = np.linspace(min_mel, max_mel, n_mels + 2)
    mel_f = _mel_to_hz_htk(mels)

    fdiff = np.diff(mel_f)
    ramps = mel_f[:, None] - fftfreqs[None, :]

    lower = -ramps[:-2] / fdiff[:-1, None]
    upper = ramps[2:] / fdiff[1:, None]
    weights = np.maximum(0.0, np.minimum(lower, upper))  # (n_mels, n_freqs)

    if norm == "slaney":
        enorm = 2.0 / (mel_f[2 : n_mels + 2] - mel_f[:n_mels])
        weights = weights * enorm[:, None]

    return weights.T.astype(np.float32)  # (n_freqs, n_mels)


# ----------------------------------------------------------------------------
# Pallas kernel: one (batch, time-tile) block; contract the full freq axis
# ----------------------------------------------------------------------------
def _mel_scale_kernel(fb_t_ref, spec_ref, out_ref):
    # fb_t_ref: (M, F) -- constant block index -> stays resident in VMEM.
    # spec_ref: (1, F, tT) -- one (batch, time-tile) slab of the spectrogram.
    # out_ref : (1, M, tT)
    fb_t = fb_t_ref[...]   # (M, F)
    spec = spec_ref[0]     # (F, tT)
    # out[m, t] = sum_f fb_t[m, f] * spec[f, t]  (canonical MXU form, f32 acc)
    out_ref[0] = jnp.dot(
        fb_t, spec, preferred_element_type=jnp.float32
    ).astype(out_ref.dtype)


def librosa_mel_scale(specgram, fb, *, tile_t=2048, compute_dtype=None):
    """specgram: (B, n_stft, T); fb: (n_stft, n_mels) -> (B, n_mels, T).

    tile_t: time-axis tile width, must be a multiple of 128. The default 2048
      gives a ~5.5 MiB double-buffered working set (safe for v5e's 16 MiB
      default scoped VMEM; plenty of headroom on v6e 128 MiB / v7x 64 MiB).
    compute_dtype: optionally cast matmul inputs (e.g. jnp.bfloat16) to halve
      HBM traffic on this bandwidth-bound op; accumulation stays f32 and the
      output keeps the original specgram dtype.
    """
    B, F, T = specgram.shape
    F2, M = fb.shape
    assert F == F2, (F, F2)
    assert tile_t > 0 and tile_t % 128 == 0, tile_t

    out_dtype = specgram.dtype
    if compute_dtype is not None:
        specgram = specgram.astype(compute_dtype)
        fb = fb.astype(compute_dtype)

    # Pre-transpose the tiny filterbank once outside the kernel (host/XLA side,
    # ~100 KiB) so the kernel never transposes through the XLU.
    fb_t = jnp.swapaxes(fb, 0, 1)  # (M, F)

    # Time tiling: if the whole T extent fits in one tile, use it directly
    # (full-array block dims are always legal); otherwise use a lane-dense
    # multiple-of-128 tile and let Pallas mask the final partial tile.
    tT = T if T <= tile_t else tile_t
    grid = (B, pl.cdiv(T, tT))

    return pl.pallas_call(
        _mel_scale_kernel,
        out_shape=jax.ShapeDtypeStruct((B, M, T), out_dtype),
        grid_spec=pltpu.PrefetchScalarGridSpec(
            num_scalar_prefetch=0,
            grid=grid,
            in_specs=[
                # Filterbank: constant block index -> fetched once, VMEM-resident.
                pl.BlockSpec((M, F), lambda b, t: (0, 0)),
                # One (batch, time-tile) slab of the spectrogram.
                pl.BlockSpec((1, F, tT), lambda b, t: (b, 0, t)),
            ],
            out_specs=pl.BlockSpec((1, M, tT), lambda b, t: (b, 0, t)),
        ),
        compiler_params=pltpu.CompilerParams(
            # No reduction grid axis (F is contracted entirely inside a block),
            # so both axes are independent -> megacore sharding even for B=1.
            dimension_semantics=("parallel", "parallel"),
        ),
    )(fb_t, specgram)


if __name__ == "__main__":
    # Module defaults: n_mels=128, sample_rate=16000, f_min=0.0, f_max=sr//2,
    # n_stft=201, norm=None, mel_scale='htk'.
    n_mels = 128
    sample_rate = 16000
    f_min = 0.0
    f_max = float(sample_rate // 2)
    n_stft = 201
    n_fft = (n_stft - 1) * 2

    fb = jnp.asarray(
        librosa_mel_fb(sample_rate, n_fft, n_mels, f_min, f_max, norm=None)
    )  # (n_stft, n_mels)

    # Small deterministic input: batch=2, freq bins=201, time frames=400
    # (T deliberately not a multiple of 128 to exercise edge handling).
    key = jax.random.PRNGKey(0)
    B, T = 2, 400
    specgram = jnp.abs(jax.random.normal(key, (B, n_stft, T), dtype=jnp.float32))

    # Reference (plain JAX) — mirrors the PyTorch forward exactly.
    ref = jnp.swapaxes(jnp.matmul(jnp.swapaxes(specgram, -1, -2), fb), -1, -2)

    # Path 1: whole-T single tile per batch (T <= tile_t).
    mel = jax.block_until_ready(librosa_mel_scale(specgram, fb))
    assert mel.shape == (B, n_mels, T)
    assert jnp.allclose(mel, ref, atol=1e-5, rtol=1e-5)

    # Path 2: tiled T with a partial final tile (400 = 3*128 + 16).
    mel_tiled = jax.block_until_ready(librosa_mel_scale(specgram, fb, tile_t=128))
    assert mel_tiled.shape == (B, n_mels, T)
    assert jnp.allclose(mel_tiled, ref, atol=1e-5, rtol=1e-5)

    print("KERNEL_OK")
</pallas_src>

<mosaic_0001>
module attributes {stable_mosaic.version = 11 : i64} {
  func.func @_mel_scale_kernel(%arg0: i32, %arg1: i32, %arg2: memref<128x201xf32, #tpu.memory_space<vmem>>, %arg3: memref<1x201x400xf32, #tpu.memory_space<vmem>>, %arg4: memref<1x128x400xf32, #tpu.memory_space<vmem>>) attributes {dimension_semantics = [#tpu.dimension_semantics<parallel>, #tpu.dimension_semantics<parallel>], iteration_bounds = array<i64: 2, 1>, scalar_prefetch = 0 : i64, scratch_operands = 0 : i64, tpu.core_type = #tpu.core_type<tc>, window_params = [{pipeline_mode = #tpu.pipeline_mode<synchronous>, transform_indices = @transform_0, window_bounds = array<i64: 128, 201>}, {transform_indices = @transform_1, window_bounds = array<i64: 1, 201, 400>}, {transform_indices = @transform_2, window_bounds = array<i64: 1, 128, 400>}]} {
    %c0 = arith.constant 0 : index
    %c0_0 = arith.constant 0 : index
    %0 = vector.load %arg2[%c0, %c0_0] : memref<128x201xf32, #tpu.memory_space<vmem>>, vector<128x201xf32>
    %c0_1 = arith.constant 0 : index
    %c0_2 = arith.constant 0 : index
    %c0_3 = arith.constant 0 : index
    %1 = vector.load %arg3[%c0_1, %c0_2, %c0_3] : memref<1x201x400xf32, #tpu.memory_space<vmem>>, vector<1x201x400xf32>
    %2 = vector.shape_cast %1 : vector<1x201x400xf32> to vector<201x400xf32>
    %cst = arith.constant dense<0.000000e+00> : vector<128x400xf32>
    %3 = tpu.matmul %0, %2, %cst {dimension_numbers = #tpu.dot_dimension_numbers<[1], [0], [0], [1], [0, 0, 1, 1], [], []>} : vector<128x201xf32>, vector<201x400xf32>, vector<128x400xf32> -> vector<128x400xf32>
    %c0_4 = arith.constant 0 : index
    %c0_5 = arith.constant 0 : index
    %c0_6 = arith.constant 0 : index
    %4 = vector.load %arg4[%c0_4, %c0_5, %c0_6] : memref<1x128x400xf32, #tpu.memory_space<vmem>>, vector<1x128x400xf32>
    %5 = vector.shape_cast %4 : vector<1x128x400xf32> to vector<128x400xf32>
    %6 = vector.shape_cast %3 : vector<128x400xf32> to vector<1x128x400xf32>
    tpu.vector_store %arg4[%c0_4, %c0_5, %c0_6], %6 {strides = array<i32>} : memref<1x128x400xf32, #tpu.memory_space<vmem>>, vector<1x128x400xf32>,
    return
  }
  func.func @transform_0(%arg0: i32, %arg1: i32) -> (i32, i32) {
    %c0_i32 = arith.constant 0 : i32
    %c0_i32_0 = arith.constant 0 : i32
    %c0_i32_1 = arith.constant 0 : i32
    return %c0_i32, %c0_i32_0 : i32, i32
  }
  func.func @transform_1(%arg0: i32, %arg1: i32) -> (i32, i32, i32) {
    %c0_i32 = arith.constant 0 : i32
    %c0_i32_0 = arith.constant 0 : i32
    return %arg0, %c0_i32, %arg1 : i32, i32, i32
  }
  func.func @transform_2(%arg0: i32, %arg1: i32) -> (i32, i32, i32) {
    %c0_i32 = arith.constant 0 : i32
    %c0_i32_0 = arith.constant 0 : i32
    return %arg0, %c0_i32, %arg1 : i32, i32, i32
  }
}

</mosaic_0001>

<llo_original>
// kernel: tpu_custom_call.1
$region0: #{tpu_custom_call.1}
  #allocation0 [shape = 'u32[]', space=smem, size = 0x4, offset = 0x4, fixed_abs, tag = 'smem constant byte address 0x4 - core index']
  #allocation1 [shape = 'u32[72,128]{1,0:T(1,128)}', space=vmem, size = 0x9000, scoped, tag = 'internal scratch']
  %s0 = inlined_call_operand.vmem [shape: f32[128,201], index: 0, kind: input, shape index: {}]
  %s1 = inlined_call_operand.vmem [shape: f32[2,201,400], index: 1, kind: input, shape index: {}]
  %s2 = inlined_call_operand.vmem [shape: f32[2,128,400], index: 2, kind: output, shape index: {}]
  %s3 = sld [smem:[#allocation0]]
  $region41: #{tpu_custom_call.1} parent=0
    _
  %s5 = ssub.s32 1, %s3
  %s6 = scalar_select 0, %s5, %s3
  loop: start=0, step=1, limit=4
  $region2: #{tpu_custom_call.1} parent=0 // loop_pre_header
    _
  $region3: #{tpu_custom_call.1} parent=0 // loop_header
    %s8 = sphi 0, %s12
    %p9 = scmp.ge.s32.totalorder %s8, 4
    %s15 = sphi 0, %s27
    %s16 = sphi 0, %s23
    %s17 = sphi 0, %s15
    %s18 = sphi 0, %s16
    %s19 = sphi 0, %s17
    %s20 = sphi 0, %s18
    %s28 = sphi 0, %s28
    %s30 = sphi 0, %s28
    %s31 = sphi 0, %s30
    %s45 = sphi 0, %s31
    %s53 = sphi 0, %s55
    %s56 = sphi 0, %s53
    %s57 = sphi 0, %s56
    %s73 = sphi 0, %s57
    %s81 = sphi 0, %s83
    %s84 = sphi 0, %s81
    %s85 = sphi 0, %s84
    %s101 = sphi 0, %s85
  $region4: #{tpu_custom_call.1} parent=0 // loop_header_branch
    %11 = sbr.rel (%p9) target = $region8
  $region5: #{tpu_custom_call.1} parent=0 // loop_body
    %s13 = ssub.s32 %s8, 1
    %s14 = ssub.s32 %s8, 2
    %s21 = sadd.s32 1, %s16
    %p22 = scmp.ge.s32.totalorder %s21, 1
    %s23 = scalar_select %p22, 0, %s21
    %s24 = sadd.s32 1, %s15
    %s25 = scalar_select %p22, %s24, %s15
    %p26 = scmp.ge.s32.totalorder %s25, 2
    %s27 = scalar_select %p26, 0, %s25
    %s29 = sadd.s32 %s28, 1
    %p32 = scmp.eq.s32.totalorder %s8, 1
    %p33 = scmp.ne.s32.totalorder %s28, %s30
    %p34 = scmp.eq.s32.totalorder %s8, 0
    %p35 = por %p33, %p34
    %p36 = scmp.ne.s32.totalorder %s28, %s30
    %p37 = scmp.eq.s32.totalorder %s13, 1
    %p38 = por %p36, %p37
    %p39 = scmp.ne.s32.totalorder %s30, %s31
    %p40 = scmp.eq.s32.totalorder %s13, 0
    %p41 = por %p39, %p40
    %p42 = scmp.ne.s32.totalorder %s30, %s31
    %p43 = scmp.eq.s32.totalorder %s14, 1
    %p44 = por %p42, %p43
    %p46 = scmp.ne.s32.totalorder %s31, %s45
    %p47 = scmp.eq.s32.totalorder %s14, 0
    %p48 = por %p46, %p47
    %s49 = ssub.s32 %s15, %s27
    %s50 = ssub.s32 %s16, %s23
    %s51 = sor.u32 %s49, %s50
    %p52 = scmp.eq.s32.totalorder %s51, 0
    %s54 = sadd.s32 %s53, 1
    %s55 = scalar_select %p52, %s53, %s54
    %p58 = pneg %p52
    %p59 = scmp.eq.s32.totalorder %s8, 1
    %p60 = por %p58, %p59
    %p61 = scmp.ne.s32.totalorder %s53, %s56
    %p62 = scmp.eq.s32.totalorder %s8, 0
    %p63 = por %p61, %p62
    %p64 = scmp.ne.s32.totalorder %s53, %s56
    %p65 = scmp.eq.s32.totalorder %s13, 1
    %p66 = por %p64, %p65
    %p67 = scmp.ne.s32.totalorder %s56, %s57
    %p68 = scmp.eq.s32.totalorder %s13, 0
    %p69 = por %p67, %p68
    %p70 = scmp.ne.s32.totalorder %s56, %s57
    %p71 = scmp.eq.s32.totalorder %s14, 1
    %p72 = por %p70, %p71
    %p74 = scmp.ne.s32.totalorder %s57, %s73
    %p75 = scmp.eq.s32.totalorder %s14, 0
    %p76 = por %p74, %p75
    %s77 = ssub.s32 %s15, %s27
    %s78 = ssub.s32 %s16, %s23
    %s79 = sor.u32 %s77, %s78
    %p80 = scmp.eq.s32.totalorder %s79, 0
    %s82 = sadd.s32 %s81, 1
    %s83 = scalar_select %p80, %s81, %s82
    %p86 = pneg %p80
    %p87 = scmp.eq.s32.totalorder %s8, 1
    %p88 = por %p86, %p87
    %p89 = scmp.ne.s32.totalorder %s81, %s84
    %p90 = scmp.eq.s32.totalorder %s8, 0
    %p91 = por %p89, %p90
    %p92 = scmp.ne.s32.totalorder %s81, %s84
    %p93 = scmp.eq.s32.totalorder %s13, 1
    %p94 = por %p92, %p93
    %p95 = scmp.ne.s32.totalorder %s84, %s85
    %p96 = scmp.eq.s32.totalorder %s13, 0
    %p97 = por %p95, %p96
    %p98 = scmp.ne.s32.totalorder %s84, %s85
    %p99 = scmp.eq.s32.totalorder %s14, 1
    %p100 = por %p98, %p99
    %p102 = scmp.ne.s32.totalorder %s85, %s101
    %p103 = scmp.eq.s32.totalorder %s14, 0
    %p104 = por %p102, %p103
    %p105 = scmp.le.s32.totalorder 1, %s8
    %p106 = scmp.lt.s32.totalorder %s8, 3
    %p107 = pnand %p105, %p106
    %p108 = pneg %p107
    // Predicated region
    $region9: #{tpu_custom_call.1} parent=5 // pred_check
      _
    $region10: #{tpu_custom_call.1} parent=5 // pred_check_branch
      %110 = sbr.rel (%p107) target = $region12
    $region11: #{tpu_custom_call.1} parent=5 // pred_region
      %s111 = ssub.s32 %s8, 1
      // Predicated region
      $region13: #{tpu_custom_call.1} parent=11 // pred_check
        %p112 = pneg %p41
      $region14: #{tpu_custom_call.1} parent=11 // pred_check_branch
        %114 = sbr.rel (%p112) target = $region16
      $region15: #{tpu_custom_call.1} parent=11 // pred_region
        _
      $region16: #{tpu_custom_call.1} parent=11 // pred_fallthru
        _
    $region12: #{tpu_custom_call.1} parent=5 // pred_fallthru
      _
    %p115 = scmp.lt.s32.totalorder %s8, 2
    // Predicated region
    $region17: #{tpu_custom_call.1} parent=5 // pred_check
      %p116 = pneg %p115
    $region18: #{tpu_custom_call.1} parent=5 // pred_check_branch
      %118 = sbr.rel (%p116) target = $region20
    $region19: #{tpu_custom_call.1} parent=5 // pred_region
      // Predicated region
      $region21: #{tpu_custom_call.1} parent=19 // pred_check
        %p119 = pneg %p63
      $region22: #{tpu_custom_call.1} parent=19 // pred_check_branch
        %121 = sbr.rel (%p119) target = $region24
      $region23: #{tpu_custom_call.1} parent=19 // pred_region
        %s122 = smul.u32 4, %s16
        %p123 = scmp.lt.s32.totalorder %s15, 1
        %s124 = scalar_select %p123, %s15, 1
        %p125 = scmp.lt.s32.totalorder %s122, 3
        %s126 = scalar_select %p125, %s122, 3
        %s127 = smul.addr %s124, 104
        %s128 = sadd.s32 %s126, %s127
        %s129 = smul.addr %s128, 8
        %s130 = scalar_lea.vmem %s1, %s129
        %s131 = smul.u32 4, %s16
      $region24: #{tpu_custom_call.1} parent=19 // pred_fallthru
        _
    $region20: #{tpu_custom_call.1} parent=5 // pred_fallthru
      _
    %p132 = scmp.le.s32.totalorder 1, %s8
    %p133 = scmp.lt.s32.totalorder %s8, 3
    %p134 = pnand %p132, %p133
    %p135 = pneg %p134
    // Predicated region
    $region25: #{tpu_custom_call.1} parent=5 // pred_check
      _
    $region26: #{tpu_custom_call.1} parent=5 // pred_check_branch
      %137 = sbr.rel (%p134) target = $region28
    $region27: #{tpu_custom_call.1} parent=5 // pred_region
      %s138 = ssub.s32 %s8, 1
      %p139 = pneg %p41
      %p140 = pneg %p38
      %s141 = smul.u32 4, %s18
      %p142 = scmp.lt.s32.totalorder %s17, 1
      %s143 = scalar_select %p142, %s17, 1
      %p144 = scmp.lt.s32.totalorder %s141, 3
      %s145 = scalar_select %p144, %s141, 3
      %s146 = smul.addr %s143, 104
      %s147 = sadd.s32 %s145, %s146
      %s148 = smul.addr %s147, 8
      %s149 = scalar_lea.vmem %s1, %s148
      %p150 = pneg %p69
      %p151 = pneg %p66
      %p152 = pneg %p97
      %p153 = pneg %p94
      %s154 = smul.u32 4, %s18
      %p155 = scmp.lt.s32.totalorder %s17, 1
      %s156 = scalar_select %p155, %s17, 1
      %p157 = scmp.lt.s32.totalorder %s154, 3
      %s158 = scalar_select %p157, %s154, 3
      %s159 = smul.addr %s156, 64
      %s160 = sadd.s32 %s158, %s159
      %s161 = smul.addr %s160, 8
      %s162 = scalar_lea.vmem %s2, %s161
      %s163 = smul.u32 4, %s18
      %p164 = scmp.lt.s32.totalorder %s17, 1
      %s165 = scalar_select %p164, %s17, 1
      %p166 = scmp.lt.s32.totalorder %s163, 3
      %s167 = scalar_select %p166, %s163, 3
      %s168 = smul.addr %s165, 104
      %s169 = sadd.s32 %s167, %s168
      %s170 = smul.addr %s169, 8
      %s171 = scalar_lea.vmem %s1, %s170
      %s172 = smul.u32 4, %s18
      %s173 = smul.u32 4, %s18
      %p174 = scmp.lt.s32.totalorder %s17, 1
      %s175 = scalar_select %p174, %s17, 1
      %p176 = scmp.lt.s32.totalorder %s173, 3
      %s177 = scalar_select %p176, %s173, 3
      %s178 = smul.addr %s175, 64
      %s179 = sadd.s32 %s177, %s178
      %s180 = smul.addr %s179, 8
      %s181 = scalar_lea.vmem %s2, %s180
      %s182 = smul.u32 4, %s18
      %v183 = vld [vmem:[%s0] sm:$0xff]
      %v184 = vld [vmem:[%s0 + $0x8] sm:$0xff]
      %v185 = vld [vmem:[%s0 + $0x10] sm:$0xff]
      %v186 = vld [vmem:[%s0 + $0x18] sm:$0xff]
      %v187 = vld [vmem:[%s0 + $0x20] sm:$0xff]
      %v188 = vld [vmem:[%s0 + $0x28] sm:$0xff]
      %v189 = vld [vmem:[%s0 + $0x30] sm:$0xff]
      %v190 = vld [vmem:[%s0 + $0x38] sm:$0xff]
      %v191 = vld [vmem:[%s0 + $0x40] sm:$0xff]
      %v192 = vld [vmem:[%s0 + $0x48] sm:$0xff]
      %v193 = vld [vmem:[%s0 + $0x50] sm:$0xff]
      %v194 = vld [vmem:[%s0 + $0x58] sm:$0xff]
      %v195 = vld [vmem:[%s0 + $0x60] sm:$0xff]
      %v196 = vld [vmem:[%s0 + $0x68] sm:$0xff]
      %v197 = vld [vmem:[%s0 + $0x70] sm:$0xff]
      %v198 = vld [vmem:[%s0 + $0x78] sm:$0xff]
      %v199 = vld [vmem:[%s0 + $0x80] sm:$0xff]
      %v200 = vld [vmem:[%s0 + $0x88] sm:$0xff]
      %v201 = vld [vmem:[%s0 + $0x90] sm:$0xff]
      %v202 = vld [vmem:[%s0 + $0x98] sm:$0xff]
      %v203 = vld [vmem:[%s0 + $0xa0] sm:$0xff]
      %v204 = vld [vmem:[%s0 + $0xa8] sm:$0xff]
      %v205 = vld [vmem:[%s0 + $0xb0] sm:$0xff]
      %v206 = vld [vmem:[%s0 + $0xb8] sm:$0xff]
      %v207 = vld [vmem:[%s0 + $0xc0] sm:$0xff]
      %v208 = vld [vmem:[%s0 + $0xc8] sm:$0xff]
      %v209 = vld [vmem:[%s0 + $0xd0] sm:$0xff]
      %v210 = vld [vmem:[%s0 + $0xd8] sm:$0xff]
      %v211 = vld [vmem:[%s0 + $0xe0] sm:$0xff]
      %v212 = vld [vmem:[%s0 + $0xe8] sm:$0xff]
      %v213 = vld [vmem:[%s0 + $0xf0] sm:$0xff]
      %v214 = vld [vmem:[%s0 + $0xf8] sm:$0xff]
      %v215 = vld [vmem:[%s171] sm:$0xff]
      %v216 = vld [vmem:[%s171 + $0x8] sm:$0xff]
      %v217 = vld [vmem:[%s171 + $0x10] sm:$0xff]
      %v218 = vld [vmem:[%s171 + $0x18] sm:$0xff]
      %v219 = vld [vmem:[%s171 + $0x20] sm:$0xff]
      %v220 = vld [vmem:[%s171 + $0x28] sm:$0xff]
      %v221 = vld [vmem:[%s171 + $0x30] sm:$0xff]
      %v222 = vld [vmem:[%s171 + $0x38] sm:$0xff]
      %v223 = vld [vmem:[%s171 + $0x40] sm:$0xff]
      %v224 = vld [vmem:[%s171 + $0x48] sm:$0xff]
      %v225 = vld [vmem:[%s171 + $0x50] sm:$0xff]
      %v226 = vld [vmem:[%s171 + $0x58] sm:$0xff]
      %v227 = vld [vmem:[%s171 + $0x60] sm:$0xff]
      %v228 = vld [vmem:[%s171 + $0x68] sm:$0xff]
      %v229 = vld [vmem:[%s171 + $0x70] sm:$0xff]
      %v230 = vld [vmem:[%s171 + $0x78] sm:$0xff]
      %v231 = vld [vmem:[%s171 + $0x80] sm:$0xff]
      %v232 = vld [vmem:[%s171 + $0x88] sm:$0xff]
      %v233 = vld [vmem:[%s171 + $0x90] sm:$0xff]
      %v234 = vld [vmem:[%s171 + $0x98] sm:$0xff]
      %v235 = vld [vmem:[%s171 + $0xa0] sm:$0xff]
      %v236 = vld [vmem:[%s171 + $0xa8] sm:$0xff]
      %v237 = vld [vmem:[%s171 + $0xb0] sm:$0xff]
      %v238 = vld [vmem:[%s171 + $0xb8] sm:$0xff]
      %v239 = vld [vmem:[%s171 + $0xc0] sm:$0xff]
      %v240 = vld [vmem:[%s171 + $0xc8] sm:$0xff]
      %v241 = vld [vmem:[%s171 + $0xd0] sm:$0xff]
      %v242 = vld [vmem:[%s171 + $0xd8] sm:$0xff]
      %v243 = vld [vmem:[%s171 + $0xe0] sm:$0xff]
      %v244 = vld [vmem:[%s171 + $0xe8] sm:$0xff]
      %v245 = vld [vmem:[%s171 + $0xf0] sm:$0xff]
      %v246 = vld [vmem:[%s171 + $0xf8] sm:$0xff]
      %v247 = vld [vmem:[%s171 + $0x100] sm:$0xff]
      %v248 = vld [vmem:[%s171 + $0x108] sm:$0xff]
      %v249 = vld [vmem:[%s171 + $0x110] sm:$0xff]
      %v250 = vld [vmem:[%s171 + $0x118] sm:$0xff]
      %v251 = vld [vmem:[%s171 + $0x120] sm:$0xff]
      %v252 = vld [vmem:[%s171 + $0x128] sm:$0xff]
      %v253 = vld [vmem:[%s171 + $0x130] sm:$0xff]
      %v254 = vld [vmem:[%s171 + $0x138] sm:$0xff]
      %v255 = vld [vmem:[%s171 + $0x140] sm:$0xff]
      %v256 = vld [vmem:[%s171 + $0x148] sm:$0xff]
      %v257 = vld [vmem:[%s171 + $0x150] sm:$0xff]
      %v258 = vld [vmem:[%s171 + $0x158] sm:$0xff]
      %v259 = vld [vmem:[%s171 + $0x160] sm:$0xff]
      %v260 = vld [vmem:[%s171 + $0x168] sm:$0xff]
      %v261 = vld [vmem:[%s171 + $0x170] sm:$0xff]
      %v262 = vld [vmem:[%s171 + $0x178] sm:$0xff]
      %v263 = vld [vmem:[%s171 + $0x180] sm:$0xff]
      %v264 = vld [vmem:[%s171 + $0x188] sm:$0xff]
      %v265 = vld [vmem:[%s171 + $0x190] sm:$0xff]
      %v266 = vld [vmem:[%s171 + $0x198] sm:$0xff]
      %v267 = vld [vmem:[%s171 + $0x1a0] sm:$0xff]
      %v268 = vld [vmem:[%s171 + $0x1a8] sm:$0xff]
      %v269 = vld [vmem:[%s171 + $0x1b0] sm:$0xff]
      %v270 = vld [vmem:[%s171 + $0x1b8] sm:$0xff]
      %v271 = vld [vmem:[%s171 + $0x1c0] sm:$0xff]
      %v272 = vld [vmem:[%s171 + $0x1c8] sm:$0xff]
      %v273 = vld [vmem:[%s171 + $0x1d0] sm:$0xff]
      %v274 = vld [vmem:[%s171 + $0x1d8] sm:$0xff]
      %v275 = vld [vmem:[%s171 + $0x1e0] sm:$0xff]
      %v276 = vld [vmem:[%s171 + $0x1e8] sm:$0xff]
      %v277 = vld [vmem:[%s171 + $0x1f0] sm:$0xff]
      %v278 = vld [vmem:[%s171 + $0x1f8] sm:$0xff]
      %v279 = vld [vmem:[%s171 + $0x200] sm:$0xff]
      %v280 = vld [vmem:[%s171 + $0x208] sm:$0xff]
      %v281 = vld [vmem:[%s171 + $0x210] sm:$0xff]
      %v282 = vld [vmem:[%s171 + $0x218] sm:$0xff]
      %v283 = vld [vmem:[%s171 + $0x220] sm:$0xff]
      %v284 = vld [vmem:[%s171 + $0x228] sm:$0xff]
      %v285 = vld [vmem:[%s171 + $0x230] sm:$0xff]
      %v286 = vld [vmem:[%s171 + $0x238] sm:$0xff]
      %v287 = vld [vmem:[%s171 + $0x240] sm:$0xff]
      %v288 = vld [vmem:[%s171 + $0x248] sm:$0xff]
      %v289 = vld [vmem:[%s171 + $0x250] sm:$0xff]
      %v290 = vld [vmem:[%s171 + $0x258] sm:$0xff]
      %v291 = vld [vmem:[%s171 + $0x260] sm:$0xff]
      %v292 = vld [vmem:[%s171 + $0x268] sm:$0xff]
      %v293 = vld [vmem:[%s171 + $0x270] sm:$0xff]
      %v294 = vld [vmem:[%s171 + $0x278] sm:$0xff]
      %v295 = vld [vmem:[%s171 + $0x280] sm:$0xff]
      %v296 = vld [vmem:[%s171 + $0x288] sm:$0xff]
      %v297 = vld [vmem:[%s171 + $0x290] sm:$0xff]
      %v298 = vld [vmem:[%s171 + $0x298] sm:$0xff]
      %v299 = vld [vmem:[%s171 + $0x2a0] sm:$0xff]
      %v300 = vld [vmem:[%s171 + $0x2a8] sm:$0xff]
      %v301 = vld [vmem:[%s171 + $0x2b0] sm:$0xff]
      %v302 = vld [vmem:[%s171 + $0x2b8] sm:$0xff]
      %v303 = vld [vmem:[%s171 + $0x2c0] sm:$0xff]
      %v304 = vld [vmem:[%s171 + $0x2c8] sm:$0xff]
      %v305 = vld [vmem:[%s171 + $0x2d0] sm:$0xff]
      %v306 = vld [vmem:[%s171 + $0x2d8] sm:$0xff]
      %v307 = vld [vmem:[%s171 + $0x2e0] sm:$0xff]
      %v308 = vld [vmem:[%s171 + $0x2e8] sm:$0xff]
      %v309 = vld [vmem:[%s171 + $0x2f0] sm:$0xff]
      %v310 = vld [vmem:[%s171 + $0x2f8] sm:$0xff]
      %v311 = vld [vmem:[%s171 + $0x300] sm:$0xff]
      %v312 = vld [vmem:[%s171 + $0x308] sm:$0xff]
      %v313 = vld [vmem:[%s171 + $0x310] sm:$0xff]
      %v314 = vld [vmem:[%s171 + $0x318] sm:$0xff]
      %v315 = vld [vmem:[%s171 + $0x320] sm:$0x1]
      %v316 = vld [vmem:[%s171 + $0x328] sm:$0x1]
      %v317 = vld [vmem:[%s171 + $0x330] sm:$0x1]
      %v318 = vld [vmem:[%s171 + $0x338] sm:$0x1]
      %vm319 = vcmask 596992
      %v321 = vsel %vm319, %v184, 0
      %v324 = vsel %vm319, %v186, 0
      %v327 = vsel %vm319, %v188, 0
      %v330 = vsel %vm319, %v190, 0
      %v333 = vsel %vm319, %v192, 0
      %v336 = vsel %vm319, %v194, 0
      %v339 = vsel %vm319, %v196, 0
      %v342 = vsel %vm319, %v198, 0
      %v345 = vsel %vm319, %v200, 0
      %v348 = vsel %vm319, %v202, 0
      %v351 = vsel %vm319, %v204, 0
      %v354 = vsel %vm319, %v206, 0
      %v357 = vsel %vm319, %v208, 0
      %v360 = vsel %vm319, %v210, 0
      %v363 = vsel %vm319, %v212, 0
      %v366 = vsel %vm319, %v214, 0
      %vm368 = vcmask 1040384
      %v370 = vsel %vm368, %v315, 0
      %v373 = vsel %vm368, %v316, 0
      %v376 = vsel %vm368, %v317, 0
      %v379 = vsel %vm368, %v318, 0
      %381 = vmatpush.msra.mxu0 %v275
      %382 = vmatpush.msra.mxu0 %v271
      %383 = vmatpush.msra.mxu0 %v267
      %384 = vmatpush.msra.mxu0 %v263
      %385 = vmatpush.msra.mxu0 %v259
      %386 = vmatpush.msra.mxu0 %v255
      %387 = vmatpush.msra.mxu0 %v251
      %388 = vmatpush.msra.mxu0 %v247
      %389 = vmatpush.msra.mxu0 %v243
      %390 = vmatpush.msra.mxu0 %v239
      %391 = vmatpush.msra.mxu0 %v235
      %392 = vmatpush.msra.mxu0 %v231
      %393 = vmatpush.msra.mxu0 %v227
      %394 = vmatpush.msra.mxu0 %v223
      %395 = vmatpush.msra.mxu0 %v219
      %396 = vmatpush.msra.mxu0 %v215
      %397 = vmatmul.f32.gmra.mxu0 %v183
      %v398 = vpop.f32.mrf.mxu0
      %v399 = vadd.f32 0.0, %v398
      %400 = vmatmul.f32.gmra.mxu0 %v185
      %v401 = vpop.f32.mrf.mxu0
      %v402 = vadd.f32 0.0, %v401
      %403 = vmatmul.f32.gmra.mxu0 %v187
      %v404 = vpop.f32.mrf.mxu0
      %v405 = vadd.f32 0.0, %v404
      %406 = vmatmul.f32.gmra.mxu0 %v189
      %v407 = vpop.f32.mrf.mxu0
      %v408 = vadd.f32 0.0, %v407
      %409 = vmatmul.f32.gmra.mxu0 %v191
      %v410 = vpop.f32.mrf.mxu0
      %v411 = vadd.f32 0.0, %v410
      %412 = vmatmul.f32.gmra.mxu0 %v193
      %v413 = vpop.f32.mrf.mxu0
      %v414 = vadd.f32 0.0, %v413
      %415 = vmatmul.f32.gmra.mxu0 %v195
      %v416 = vpop.f32.mrf.mxu0
      %v417 = vadd.f32 0.0, %v416
      %418 = vmatmul.f32.gmra.mxu0 %v197
      %v419 = vpop.f32.mrf.mxu0
      %v420 = vadd.f32 0.0, %v419
      %421 = vmatmul.f32.gmra.mxu0 %v199
      %v422 = vpop.f32.mrf.mxu0
      %v423 = vadd.f32 0.0, %v422
      %424 = vmatmul.f32.gmra.mxu0 %v201
      %v425 = vpop.f32.mrf.mxu0
      %v426 = vadd.f32 0.0, %v425
      %427 = vmatmul.f32.gmra.mxu0 %v203
      %v428 = vpop.f32.mrf.mxu0
      %v429 = vadd.f32 0.0, %v428
      %430 = vmatmul.f32.gmra.mxu0 %v205
      %v431 = vpop.f32.mrf.mxu0
      %v432 = vadd.f32 0.0, %v431
      %433 = vmatmul.f32.gmra.mxu0 %v207
      %v434 = vpop.f32.mrf.mxu0
      %v435 = vadd.f32 0.0, %v434
      %436 = vmatmul.f32.gmra.mxu0 %v209
      %v437 = vpop.f32.mrf.mxu0
      %v438 = vadd.f32 0.0, %v437
      %439 = vmatmul.f32.gmra.mxu0 %v211
      %v440 = vpop.f32.mrf.mxu0
      %v441 = vadd.f32 0.0, %v440
      %442 = vmatmul.f32.gmra.mxu0 %v213
      %v443 = vpop.f32.mrf.mxu0
      %v444 = vadd.f32 0.0, %v443
      %445 = vdwg.mxu0
      %446 = vmatpush.msra.mxu0 0.0
      %447 = vmatpush.msra.mxu0 0.0
      %448 = vmatpush.msra.mxu0 0.0
      %449 = vmatpush.msra.mxu0 0.0
      %450 = vmatpush.msra.mxu0 0.0
      %451 = vmatpush.msra.mxu0 0.0
      %452 = vmatpush.msra.mxu0 %v370
      %453 = vmatpush.msra.mxu0 %v311
      %454 = vmatpush.msra.mxu0 %v307
      %455 = vmatpush.msra.mxu0 %v303
      %456 = vmatpush.msra.mxu0 %v299
      %457 = vmatpush.msra.mxu0 %v295
      %458 = vmatpush.msra.mxu0 %v291
      %459 = vmatpush.msra.mxu0 %v287
      %460 = vmatpush.msra.mxu0 %v283
      %461 = vmatpush.msra.mxu0 %v279
      %462 = vmatmul.f32.gmra.mxu0 %v321
      %v463 = vpop.f32.mrf.mxu0
      %v464 = vadd.f32 %v399, %v463
      %465 = vmatmul.f32.gmra.mxu0 %v324
      %v466 = vpop.f32.mrf.mxu0
      %v467 = vadd.f32 %v402, %v466
      %468 = vmatmul.f32.gmra.mxu0 %v327
      %v469 = vpop.f32.mrf.mxu0
      %v470 = vadd.f32 %v405, %v469
      %471 = vmatmul.f32.gmra.mxu0 %v330
      %v472 = vpop.f32.mrf.mxu0
      %v473 = vadd.f32 %v408, %v472
      %474 = vmatmul.f32.gmra.mxu0 %v333
      %v475 = vpop.f32.mrf.mxu0
      %v476 = vadd.f32 %v411, %v475
      %477 = vmatmul.f32.gmra.mxu0 %v336
      %v478 = vpop.f32.mrf.mxu0
      %v479 = vadd.f32 %v414, %v478
      %480 = vmatmul.f32.gmra.mxu0 %v339
      %v481 = vpop.f32.mrf.mxu0
      %v482 = vadd.f32 %v417, %v481
      %483 = vmatmul.f32.gmra.mxu0 %v342
      %v484 = vpop.f32.mrf.mxu0
      %v485 = vadd.f32 %v420, %v484
      %486 = vmatmul.f32.gmra.mxu0 %v345
      %v487 = vpop.f32.mrf.mxu0
      %v488 = vadd.f32 %v423, %v487
      %489 = vmatmul.f32.gmra.mxu0 %v348
      %v490 = vpop.f32.mrf.mxu0
      %v491 = vadd.f32 %v426, %v490
      %492 = vmatmul.f32.gmra.mxu0 %v351
      %v493 = vpop.f32.mrf.mxu0
      %v494 = vadd.f32 %v429, %v493
      %495 = vmatmul.f32.gmra.mxu0 %v354
      %v496 = vpop.f32.mrf.mxu0
      %v497 = vadd.f32 %v432, %v496
      %498 = vmatmul.f32.gmra.mxu0 %v357
      %v499 = vpop.f32.mrf.mxu0
      %v500 = vadd.f32 %v435, %v499
      %501 = vmatmul.f32.gmra.mxu0 %v360
      %v502 = vpop.f32.mrf.mxu0
      %v503 = vadd.f32 %v438, %v502
      %504 = vmatmul.f32.gmra.mxu0 %v363
      %v505 = vpop.f32.mrf.mxu0
      %v506 = vadd.f32 %v441, %v505
      %507 = vmatmul.f32.gmra.mxu0 %v366
      %v508 = vpop.f32.mrf.mxu0
      %v509 = vadd.f32 %v444, %v508
      %510 = vdwg.mxu0
      %511 = vmatpush.msra.mxu0 %v276
      %512 = vmatpush.msra.mxu0 %v272
      %513 = vmatpush.msra.mxu0 %v268
      %514 = vmatpush.msra.mxu0 %v264
      %515 = vmatpush.msra.mxu0 %v260
      %516 = vmatpush.msra.mxu0 %v256
      %517 = vmatpush.msra.mxu0 %v252
      %518 = vmatpush.msra.mxu0 %v248
      %519 = vmatpush.msra.mxu0 %v244
      %520 = vmatpush.msra.mxu0 %v240
      %521 = vmatpush.msra.mxu0 %v236
      %522 = vmatpush.msra.mxu0 %v232
      %523 = vmatpush.msra.mxu0 %v228
      %524 = vmatpush.msra.mxu0 %v224
      %525 = vmatpush.msra.mxu0 %v220
      %526 = vmatpush.msra.mxu0 %v216
      %527 = vmatmul.f32.gmra.mxu0 %v183
      %v528 = vpop.f32.mrf.mxu0
      %v529 = vadd.f32 0.0, %v528
      %530 = vmatmul.f32.gmra.mxu0 %v185
      %v531 = vpop.f32.mrf.mxu0
      %v532 = vadd.f32 0.0, %v531
      %533 = vmatmul.f32.gmra.mxu0 %v187
      %v534 = vpop.f32.mrf.mxu0
      %v535 = vadd.f32 0.0, %v534
      %536 = vmatmul.f32.gmra.mxu0 %v189
      %v537 = vpop.f32.mrf.mxu0
      %v538 = vadd.f32 0.0, %v537
      %539 = vmatmul.f32.gmra.mxu0 %v191
      %v540 = vpop.f32.mrf.mxu0
      %v541 = vadd.f32 0.0, %v540
      %542 = vmatmul.f32.gmra.mxu0 %v193
      %v543 = vpop.f32.mrf.mxu0
      %v544 = vadd.f32 0.0, %v543
      %545 = vmatmul.f32.gmra.mxu0 %v195
      %v546 = vpop.f32.mrf.mxu0
      %v547 = vadd.f32 0.0, %v546
      %548 = vmatmul.f32.gmra.mxu0 %v197
      %v549 = vpop.f32.mrf.mxu0
      %v550 = vadd.f32 0.0, %v549
      %551 = vmatmul.f32.gmra.mxu0 %v199
      %v552 = vpop.f32.mrf.mxu0
      %v553 = vadd.f32 0.0, %v552
      %554 = vmatmul.f32.gmra.mxu0 %v201
      %v555 = vpop.f32.mrf.mxu0
      %v556 = vadd.f32 0.0, %v555
      %557 = vmatmul.f32.gmra.mxu0 %v203
      %v558 = vpop.f32.mrf.mxu0
      %v559 = vadd.f32 0.0, %v558
      %560 = vmatmul.f32.gmra.mxu0 %v205
      %v561 = vpop.f32.mrf.mxu0
      %v562 = vadd.f32 0.0, %v561
      %563 = vmatmul.f32.gmra.mxu0 %v207
      %v564 = vpop.f32.mrf.mxu0
      %v565 = vadd.f32 0.0, %v564
      %566 = vmatmul.f32.gmra.mxu0 %v209
      %v567 = vpop.f32.mrf.mxu0
      %v568 = vadd.f32 0.0, %v567
      %569 = vmatmul.f32.gmra.mxu0 %v211
      %v570 = vpop.f32.mrf.mxu0
      %v571 = vadd.f32 0.0, %v570
      %572 = vmatmul.f32.gmra.mxu0 %v213
      %v573 = vpop.f32.mrf.mxu0
      %v574 = vadd.f32 0.0, %v573
      %575 = vdwg.mxu0
      %576 = vmatpush.msra.mxu0 0.0
      %577 = vmatpush.msra.mxu0 0.0
      %578 = vmatpush.msra.mxu0 0.0
      %579 = vmatpush.msra.mxu0 0.0
      %580 = vmatpush.msra.mxu0 0.0
      %581 = vmatpush.msra.mxu0 0.0
      %582 = vmatpush.msra.mxu0 %v373
      %583 = vmatpush.msra.mxu0 %v312
      %584 = vmatpush.msra.mxu0 %v308
      %585 = vmatpush.msra.mxu0 %v304
      %586 = vmatpush.msra.mxu0 %v300
      %587 = vmatpush.msra.mxu0 %v296
      %588 = vmatpush.msra.mxu0 %v292
      %589 = vmatpush.msra.mxu0 %v288
      %590 = vmatpush.msra.mxu0 %v284
      %591 = vmatpush.msra.mxu0 %v280
      %592 = vmatmul.f32.gmra.mxu0 %v321
      %v593 = vpop.f32.mrf.mxu0
      %v594 = vadd.f32 %v529, %v593
      %595 = vmatmul.f32.gmra.mxu0 %v324
      %v596 = vpop.f32.mrf.mxu0
      %v597 = vadd.f32 %v532, %v596
      %598 = vmatmul.f32.gmra.mxu0 %v327
      %v599 = vpop.f32.mrf.mxu0
      %v600 = vadd.f32 %v535, %v599
      %601 = vmatmul.f32.gmra.mxu0 %v330
      %v602 = vpop.f32.mrf.mxu0
      %v603 = vadd.f32 %v538, %v602
      %604 = vmatmul.f32.gmra.mxu0 %v333
      %v605 = vpop.f32.mrf.mxu0
      %v606 = vadd.f32 %v541, %v605
      %607 = vmatmul.f32.gmra.mxu0 %v336
      %v608 = vpop.f32.mrf.mxu0
      %v609 = vadd.f32 %v544, %v608
      %610 = vmatmul.f32.gmra.mxu0 %v339
      %v611 = vpop.f32.mrf.mxu0
      %v612 = vadd.f32 %v547, %v611
      %613 = vmatmul.f32.gmra.mxu0 %v342
      %v614 = vpop.f32.mrf.mxu0
      %v615 = vadd.f32 %v550, %v614
      %616 = vmatmul.f32.gmra.mxu0 %v345
      %v617 = vpop.f32.mrf.mxu0
      %v618 = vadd.f32 %v553, %v617
      %619 = vmatmul.f32.gmra.mxu0 %v348
      %v620 = vpop.f32.mrf.mxu0
      %v621 = vadd.f32 %v556, %v620
      %622 = vmatmul.f32.gmra.mxu0 %v351
      %v623 = vpop.f32.mrf.mxu0
      %v624 = vadd.f32 %v559, %v623
      %625 = vmatmul.f32.gmra.mxu0 %v354
      %v626 = vpop.f32.mrf.mxu0
      %v627 = vadd.f32 %v562, %v626
      %628 = vmatmul.f32.gmra.mxu0 %v357
      %v629 = vpop.f32.mrf.mxu0
      %v630 = vadd.f32 %v565, %v629
      %631 = vmatmul.f32.gmra.mxu0 %v360
      %v632 = vpop.f32.mrf.mxu0
      %v633 = vadd.f32 %v568, %v632
      %634 = vmatmul.f32.gmra.mxu0 %v363
      %v635 = vpop.f32.mrf.mxu0
      %v636 = vadd.f32 %v571, %v635
      %637 = vmatmul.f32.gmra.mxu0 %v366
      %v638 = vpop.f32.mrf.mxu0
      %v639 = vadd.f32 %v574, %v638
      %640 = vdwg.mxu0
      %641 = vmatpush.msra.mxu0 %v277
      %642 = vmatpush.msra.mxu0 %v273
      %643 = vmatpush.msra.mxu0 %v269
      %644 = vmatpush.msra.mxu0 %v265
      %645 = vmatpush.msra.mxu0 %v261
      %646 = vmatpush.msra.mxu0 %v257
      %647 = vmatpush.msra.mxu0 %v253
      %648 = vmatpush.msra.mxu0 %v249
      %649 = vmatpush.msra.mxu0 %v245
      %650 = vmatpush.msra.mxu0 %v241
      %651 = vmatpush.msra.mxu0 %v237
      %652 = vmatpush.msra.mxu0 %v233
      %653 = vmatpush.msra.mxu0 %v229
      %654 = vmatpush.msra.mxu0 %v225
      %655 = vmatpush.msra.mxu0 %v221
      %656 = vmatpush.msra.mxu0 %v217
      %657 = vmatmul.f32.gmra.mxu0 %v183
      %v658 = vpop.f32.mrf.mxu0
      %v659 = vadd.f32 0.0, %v658
      %660 = vmatmul.f32.gmra.mxu0 %v185
      %v661 = vpop.f32.mrf.mxu0
      %v662 = vadd.f32 0.0, %v661
      %663 = vmatmul.f32.gmra.mxu0 %v187
      %v664 = vpop.f32.mrf.mxu0
      %v665 = vadd.f32 0.0, %v664
      %666 = vmatmul.f32.gmra.mxu0 %v189
      %v667 = vpop.f32.mrf.mxu0
      %v668 = vadd.f32 0.0, %v667
      %669 = vmatmul.f32.gmra.mxu0 %v191
      %v670 = vpop.f32.mrf.mxu0
      %v671 = vadd.f32 0.0, %v670
      %672 = vmatmul.f32.gmra.mxu0 %v193
      %v673 = vpop.f32.mrf.mxu0
      %v674 = vadd.f32 0.0, %v673
      %675 = vmatmul.f32.gmra.mxu0 %v195
      %v676 = vpop.f32.mrf.mxu0
      %v677 = vadd.f32 0.0, %v676
      %678 = vmatmul.f32.gmra.mxu0 %v197
      %v679 = vpop.f32.mrf.mxu0
      %v680 = vadd.f32 0.0, %v679
      %681 = vmatmul.f32.gmra.mxu0 %v199
      %v682 = vpop.f32.mrf.mxu0
      %v683 = vadd.f32 0.0, %v682
      %684 = vmatmul.f32.gmra.mxu0 %v201
      %v685 = vpop.f32.mrf.mxu0
      %v686 = vadd.f32 0.0, %v685
      %687 = vmatmul.f32.gmra.mxu0 %v203
      %v688 = vpop.f32.mrf.mxu0
      %v689 = vadd.f32 0.0, %v688
      %690 = vmatmul.f32.gmra.mxu0 %v205
      %v691 = vpop.f32.mrf.mxu0
      %v692 = vadd.f32 0.0, %v691
      %693 = vmatmul.f32.gmra.mxu0 %v207
      %v694 = vpop.f32.mrf.mxu0
      %v695 = vadd.f32 0.0, %v694
      %696 = vmatmul.f32.gmra.mxu0 %v209
      %v697 = vpop.f32.mrf.mxu0
      %v698 = vadd.f32 0.0, %v697
      %699 = vmatmul.f32.gmra.mxu0 %v211
      %v700 = vpop.f32.mrf.mxu0
      %v701 = vadd.f32 0.0, %v700
      %702 = vmatmul.f32.gmra.mxu0 %v213
      %v703 = vpop.f32.mrf.mxu0
      %v704 = vadd.f32 0.0, %v703
      %705 = vdwg.mxu0
      %706 = vmatpush.msra.mxu0 0.0
      %707 = vmatpush.msra.mxu0 0.0
      %708 = vmatpush.msra.mxu0 0.0
      %709 = vmatpush.msra.mxu0 0.0
      %710 = vmatpush.msra.mxu0 0.0
      %711 = vmatpush.msra.mxu0 0.0
      %712 = vmatpush.msra.mxu0 %v376
      %713 = vmatpush.msra.mxu0 %v313
      %714 = vmatpush.msra.mxu0 %v309
      %715 = vmatpush.msra.mxu0 %v305
      %716 = vmatpush.msra.mxu0 %v301
      %717 = vmatpush.msra.mxu0 %v297
      %718 = vmatpush.msra.mxu0 %v293
      %719 = vmatpush.msra.mxu0 %v289
      %720 = vmatpush.msra.mxu0 %v285
      %721 = vmatpush.msra.mxu0 %v281
      %722 = vmatmul.f32.gmra.mxu0 %v321
      %v723 = vpop.f32.mrf.mxu0
      %v724 = vadd.f32 %v659, %v723
      %725 = vmatmul.f32.gmra.mxu0 %v324
      %v726 = vpop.f32.mrf.mxu0
      %v727 = vadd.f32 %v662, %v726
      %728 = vmatmul.f32.gmra.mxu0 %v327
      %v729 = vpop.f32.mrf.mxu0
      %v730 = vadd.f32 %v665, %v729
      %731 = vmatmul.f32.gmra.mxu0 %v330
      %v732 = vpop.f32.mrf.mxu0
      %v733 = vadd.f32 %v668, %v732
      %734 = vmatmul.f32.gmra.mxu0 %v333
      %v735 = vpop.f32.mrf.mxu0
      %v736 = vadd.f32 %v671, %v735
      %737 = vmatmul.f32.gmra.mxu0 %v336
      %v738 = vpop.f32.mrf.mxu0
      %v739 = vadd.f32 %v674, %v738
      %740 = vmatmul.f32.gmra.mxu0 %v339
      %v741 = vpop.f32.mrf.mxu0
      %v742 = vadd.f32 %v677, %v741
      %743 = vmatmul.f32.gmra.mxu0 %v342
      %v744 = vpop.f32.mrf.mxu0
      %v745 = vadd.f32 %v680, %v744
      %746 = vmatmul.f32.gmra.mxu0 %v345
      %v747 = vpop.f32.mrf.mxu0
      %v748 = vadd.f32 %v683, %v747
      %749 = vmatmul.f32.gmra.mxu0 %v348
      %v750 = vpop.f32.mrf.mxu0
      %v751 = vadd.f32 %v686, %v750
      %752 = vmatmul.f32.gmra.mxu0 %v351
      %v753 = vpop.f32.mrf.mxu0
      %v754 = vadd.f32 %v689, %v753
      %755 = vmatmul.f32.gmra.mxu0 %v354
      %v756 = vpop.f32.mrf.mxu0
      %v757 = vadd.f32 %v692, %v756
      %758 = vmatmul.f32.gmra.mxu0 %v357
      %v759 = vpop.f32.mrf.mxu0
      %v760 = vadd.f32 %v695, %v759
      %761 = vmatmul.f32.gmra.mxu0 %v360
      %v762 = vpop.f32.mrf.mxu0
      %v763 = vadd.f32 %v698, %v762
      %764 = vmatmul.f32.gmra.mxu0 %v363
      %v765 = vpop.f32.mrf.mxu0
      %v766 = vadd.f32 %v701, %v765
      %767 = vmatmul.f32.gmra.mxu0 %v366
      %v768 = vpop.f32.mrf.mxu0
      %v769 = vadd.f32 %v704, %v768
      %770 = vdwg.mxu0
      %771 = vmatpush.msra.mxu0 %v278
      %772 = vmatpush.msra.mxu0 %v274
      %773 = vmatpush.msra.mxu0 %v270
      %774 = vmatpush.msra.mxu0 %v266
      %775 = vmatpush.msra.mxu0 %v262
      %776 = vmatpush.msra.mxu0 %v258
      %777 = vmatpush.msra.mxu0 %v254
      %778 = vmatpush.msra.mxu0 %v250
      %779 = vmatpush.msra.mxu0 %v246
      %780 = vmatpush.msra.mxu0 %v242
      %781 = vmatpush.msra.mxu0 %v238
      %782 = vmatpush.msra.mxu0 %v234
      %783 = vmatpush.msra.mxu0 %v230
      %784 = vmatpush.msra.mxu0 %v226
      %785 = vmatpush.msra.mxu0 %v222
      %786 = vmatpush.msra.mxu0 %v218
      %787 = vmatmul.f32.gmra.mxu0 %v183
      %v788 = vpop.f32.mrf.mxu0
      %v789 = vadd.f32 0.0, %v788
      %790 = vmatmul.f32.gmra.mxu0 %v185
      %v791 = vpop.f32.mrf.mxu0
      %v792 = vadd.f32 0.0, %v791
      %793 = vmatmul.f32.gmra.mxu0 %v187
      %v794 = vpop.f32.mrf.mxu0
      %v795 = vadd.f32 0.0, %v794
      %796 = vmatmul.f32.gmra.mxu0 %v189
      %v797 = vpop.f32.mrf.mxu0
      %v798 = vadd.f32 0.0, %v797
      %799 = vmatmul.f32.gmra.mxu0 %v191
      %v800 = vpop.f32.mrf.mxu0
      %v801 = vadd.f32 0.0, %v800
      %802 = vmatmul.f32.gmra.mxu0 %v193
      %v803 = vpop.f32.mrf.mxu0
      %v804 = vadd.f32 0.0, %v803
      %805 = vmatmul.f32.gmra.mxu0 %v195
      %v806 = vpop.f32.mrf.mxu0
      %v807 = vadd.f32 0.0, %v806
      %808 = vmatmul.f32.gmra.mxu0 %v197
      %v809 = vpop.f32.mrf.mxu0
      %v810 = vadd.f32 0.0, %v809
      %811 = vmatmul.f32.gmra.mxu0 %v199
      %v812 = vpop.f32.mrf.mxu0
      %v813 = vadd.f32 0.0, %v812
      %814 = vmatmul.f32.gmra.mxu0 %v201
      %v815 = vpop.f32.mrf.mxu0
      %v816 = vadd.f32 0.0, %v815
      %817 = vmatmul.f32.gmra.mxu0 %v203
      %v818 = vpop.f32.mrf.mxu0
      %v819 = vadd.f32 0.0, %v818
      %820 = vmatmul.f32.gmra.mxu0 %v205
      %v821 = vpop.f32.mrf.mxu0
      %v822 = vadd.f32 0.0, %v821
      %823 = vmatmul.f32.gmra.mxu0 %v207
      %v824 = vpop.f32.mrf.mxu0
      %v825 = vadd.f32 0.0, %v824
      %826 = vmatmul.f32.gmra.mxu0 %v209
      %v827 = vpop.f32.mrf.mxu0
      %v828 = vadd.f32 0.0, %v827
      %829 = vmatmul.f32.gmra.mxu0 %v211
      %v830 = vpop.f32.mrf.mxu0
      %v831 = vadd.f32 0.0, %v830
      %832 = vmatmul.f32.gmra.mxu0 %v213
      %v833 = vpop.f32.mrf.mxu0
      %v834 = vadd.f32 0.0, %v833
      %835 = vdwg.mxu0
      %836 = vmatpush.msra.mxu0 0.0
      %837 = vmatpush.msra.mxu0 0.0
      %838 = vmatpush.msra.mxu0 0.0
      %839 = vmatpush.msra.mxu0 0.0
      %840 = vmatpush.msra.mxu0 0.0
      %841 = vmatpush.msra.mxu0 0.0
      %842 = vmatpush.msra.mxu0 %v379
      %843 = vmatpush.msra.mxu0 %v314
      %844 = vmatpush.msra.mxu0 %v310
      %845 = vmatpush.msra.mxu0 %v306
      %846 = vmatpush.msra.mxu0 %v302
      %847 = vmatpush.msra.mxu0 %v298
      %848 = vmatpush.msra.mxu0 %v294
      %849 = vmatpush.msra.mxu0 %v290
      %850 = vmatpush.msra.mxu0 %v286
      %851 = vmatpush.msra.mxu0 %v282
      %852 = vmatmul.f32.gmra.mxu0 %v321
      %v853 = vpop.f32.mrf.mxu0
      %v854 = vadd.f32 %v789, %v853
      %855 = vmatmul.f32.gmra.mxu0 %v324
      %v856 = vpop.f32.mrf.mxu0
      %v857 = vadd.f32 %v792, %v856
      %858 = vmatmul.f32.gmra.mxu0 %v327
      %v859 = vpop.f32.mrf.mxu0
      %v860 = vadd.f32 %v795, %v859
      %861 = vmatmul.f32.gmra.mxu0 %v330
      %v862 = vpop.f32.mrf.mxu0
      %v863 = vadd.f32 %v798, %v862
      %864 = vmatmul.f32.gmra.mxu0 %v333
      %v865 = vpop.f32.mrf.mxu0
      %v866 = vadd.f32 %v801, %v865
      %867 = vmatmul.f32.gmra.mxu0 %v336
      %v868 = vpop.f32.mrf.mxu0
      %v869 = vadd.f32 %v804, %v868
      %870 = vmatmul.f32.gmra.mxu0 %v339
      %v871 = vpop.f32.mrf.mxu0
      %v872 = vadd.f32 %v807, %v871
      %873 = vmatmul.f32.gmra.mxu0 %v342
      %v874 = vpop.f32.mrf.mxu0
      %v875 = vadd.f32 %v810, %v874
      %876 = vmatmul.f32.gmra.mxu0 %v345
      %v877 = vpop.f32.mrf.mxu0
      %v878 = vadd.f32 %v813, %v877
      %879 = vmatmul.f32.gmra.mxu0 %v348
      %v880 = vpop.f32.mrf.mxu0
      %v881 = vadd.f32 %v816, %v880
      %882 = vmatmul.f32.gmra.mxu0 %v351
      %v883 = vpop.f32.mrf.mxu0
      %v884 = vadd.f32 %v819, %v883
      %885 = vmatmul.f32.gmra.mxu0 %v354
      %v886 = vpop.f32.mrf.mxu0
      %v887 = vadd.f32 %v822, %v886
      %888 = vmatmul.f32.gmra.mxu0 %v357
      %v889 = vpop.f32.mrf.mxu0
      %v890 = vadd.f32 %v825, %v889
      %891 = vmatmul.f32.gmra.mxu0 %v360
      %v892 = vpop.f32.mrf.mxu0
      %v893 = vadd.f32 %v828, %v892
      %894 = vmatmul.f32.gmra.mxu0 %v363
      %v895 = vpop.f32.mrf.mxu0
      %v896 = vadd.f32 %v831, %v895
      %897 = vmatmul.f32.gmra.mxu0 %v366
      %v898 = vpop.f32.mrf.mxu0
      %v899 = vadd.f32 %v834, %v898
      %900 = vdwg.mxu0
      %901 = vst [vmem:[%s181] sm:$0xff] %v464
      %902 = vst [vmem:[%s181 + $0x8] sm:$0xff] %v594
      %903 = vst [vmem:[%s181 + $0x10] sm:$0xff] %v724
      %vm904 = vcmask 130048
      %905 = vst.msk [vmem:[%s181 + $0x18] sm:$0xff] %vm904, %v854
      %906 = vst [vmem:[%s181 + $0x20] sm:$0xff] %v467
      %907 = vst [vmem:[%s181 + $0x28] sm:$0xff] %v597
      %908 = vst [vmem:[%s181 + $0x30] sm:$0xff] %v727
      %909 = vst.msk [vmem:[%s181 + $0x38] sm:$0xff] %vm904, %v857
      %910 = vst [vmem:[%s181 + $0x40] sm:$0xff] %v470
      %911 = vst [vmem:[%s181 + $0x48] sm:$0xff] %v600
      %912 = vst [vmem:[%s181 + $0x50] sm:$0xff] %v730
      %913 = vst.msk [vmem:[%s181 + $0x58] sm:$0xff] %vm904, %v860
      %914 = vst [vmem:[%s181 + $0x60] sm:$0xff] %v473
      %915 = vst [vmem:[%s181 + $0x68] sm:$0xff] %v603
      %916 = vst [vmem:[%s181 + $0x70] sm:$0xff] %v733
      %917 = vst.msk [vmem:[%s181 + $0x78] sm:$0xff] %vm904, %v863
      %918 = vst [vmem:[%s181 + $0x80] sm:$0xff] %v476
      %919 = vst [vmem:[%s181 + $0x88] sm:$0xff] %v606
      %920 = vst [vmem:[%s181 + $0x90] sm:$0xff] %v736
      %921 = vst.msk [vmem:[%s181 + $0x98] sm:$0xff] %vm904, %v866
      %922 = vst [vmem:[%s181 + $0xa0] sm:$0xff] %v479
      %923 = vst [vmem:[%s181 + $0xa8] sm:$0xff] %v609
      %924 = vst [vmem:[%s181 + $0xb0] sm:$0xff] %v739
      %925 = vst.msk [vmem:[%s181 + $0xb8] sm:$0xff] %vm904, %v869
      %926 = vst [vmem:[%s181 + $0xc0] sm:$0xff] %v482
      %927 = vst [vmem:[%s181 + $0xc8] sm:$0xff] %v612
      %928 = vst [vmem:[%s181 + $0xd0] sm:$0xff] %v742
      %929 = vst.msk [vmem:[%s181 + $0xd8] sm:$0xff] %vm904, %v872
      %930 = vst [vmem:[%s181 + $0xe0] sm:$0xff] %v485
      %931 = vst [vmem:[%s181 + $0xe8] sm:$0xff] %v615
      %932 = vst [vmem:[%s181 + $0xf0] sm:$0xff] %v745
      %933 = vst.msk [vmem:[%s181 + $0xf8] sm:$0xff] %vm904, %v875
      %934 = vst [vmem:[%s181 + $0x100] sm:$0xff] %v488
      %935 = vst [vmem:[%s181 + $0x108] sm:$0xff] %v618
      %936 = vst [vmem:[%s181 + $0x110] sm:$0xff] %v748
      %937 = vst.msk [vmem:[%s181 + $0x118] sm:$0xff] %vm904, %v878
      %938 = vst [vmem:[%s181 + $0x120] sm:$0xff] %v491
      %939 = vst [vmem:[%s181 + $0x128] sm:$0xff] %v621
      %940 = vst [vmem:[%s181 + $0x130] sm:$0xff] %v751
      %941 = vst.msk [vmem:[%s181 + $0x138] sm:$0xff] %vm904, %v881
      %942 = vst [vmem:[%s181 + $0x140] sm:$0xff] %v494
      %943 = vst [vmem:[%s181 + $0x148] sm:$0xff] %v624
      %944 = vst [vmem:[%s181 + $0x150] sm:$0xff] %v754
      %945 = vst.msk [vmem:[%s181 + $0x158] sm:$0xff] %vm904, %v884
      %946 = vst [vmem:[%s181 + $0x160] sm:$0xff] %v497
      %947 = vst [vmem:[%s181 + $0x168] sm:$0xff] %v627
      %948 = vst [vmem:[%s181 + $0x170] sm:$0xff] %v757
      %949 = vst.msk [vmem:[%s181 + $0x178] sm:$0xff] %vm904, %v887
      %950 = vst [vmem:[%s181 + $0x180] sm:$0xff] %v500
      %951 = vst [vmem:[%s181 + $0x188] sm:$0xff] %v630
      %952 = vst [vmem:[%s181 + $0x190] sm:$0xff] %v760
      %953 = vst.msk [vmem:[%s181 + $0x198] sm:$0xff] %vm904, %v890
      %954 = vst [vmem:[%s181 + $0x1a0] sm:$0xff] %v503
      %955 = vst [vmem:[%s181 + $0x1a8] sm:$0xff] %v633
      %956 = vst [vmem:[%s181 + $0x1b0] sm:$0xff] %v763
      %957 = vst.msk [vmem:[%s181 + $0x1b8] sm:$0xff] %vm904, %v893
      %958 = vst [vmem:[%s181 + $0x1c0] sm:$0xff] %v506
      %959 = vst [vmem:[%s181 + $0x1c8] sm:$0xff] %v636
      %960 = vst [vmem:[%s181 + $0x1d0] sm:$0xff] %v766
      %961 = vst.msk [vmem:[%s181 + $0x1d8] sm:$0xff] %vm904, %v896
      %962 = vst [vmem:[%s181 + $0x1e0] sm:$0xff] %v509
      %963 = vst [vmem:[%s181 + $0x1e8] sm:$0xff] %v639
      %964 = vst [vmem:[%s181 + $0x1f0] sm:$0xff] %v769
      %965 = vst.msk [vmem:[%s181 + $0x1f8] sm:$0xff] %vm904, %v899
      %s966 = smul.u32 4, %s18
      %p967 = scmp.lt.s32.totalorder %s17, 1
      %s968 = scalar_select %p967, %s17, 1
      %p969 = scmp.lt.s32.totalorder %s966, 3
      %s970 = scalar_select %p969, %s966, 3
      %s971 = smul.addr %s968, 64
      %s972 = sadd.s32 %s970, %s971
      %s973 = smul.addr %s972, 8
      %s974 = scalar_lea.vmem %s2, %s973
      // Predicated region
      $region29: #{tpu_custom_call.1} parent=27 // pred_check
        %p975 = pneg %p94
      $region30: #{tpu_custom_call.1} parent=27 // pred_check_branch
        %977 = sbr.rel (%p975) target = $region32
      $region31: #{tpu_custom_call.1} parent=27 // pred_region
        %s978 = smul.u32 4, %s18
      $region32: #{tpu_custom_call.1} parent=27 // pred_fallthru
        _
    $region28: #{tpu_custom_call.1} parent=5 // pred_fallthru
      _
    %p979 = scmp.le.s32.totalorder 2, %s8
    // Predicated region
    $region33: #{tpu_custom_call.1} parent=5 // pred_check
      %p980 = pneg %p979
    $region34: #{tpu_custom_call.1} parent=5 // pred_check_branch
      %982 = sbr.rel (%p980) target = $region36
    $region35: #{tpu_custom_call.1} parent=5 // pred_region
      %s983 = ssub.s32 %s8, 2
      // Predicated region
      $region37: #{tpu_custom_call.1} parent=35 // pred_check
        %p984 = pneg %p100
      $region38: #{tpu_custom_call.1} parent=35 // pred_check_branch
        %986 = sbr.rel (%p984) target = $region40
      $region39: #{tpu_custom_call.1} parent=35 // pred_region
        %s987 = smul.u32 4, %s20
        %p988 = scmp.lt.s32.totalorder %s19, 1
        %s989 = scalar_select %p988, %s19, 1
        %p990 = scmp.lt.s32.totalorder %s987, 3
        %s991 = scalar_select %p990, %s987, 3
        %s992 = smul.addr %s989, 64
        %s993 = sadd.s32 %s991, %s992
        %s994 = smul.addr %s993, 8
        %s995 = scalar_lea.vmem %s2, %s994
      $region40: #{tpu_custom_call.1} parent=35 // pred_fallthru
        _
    $region36: #{tpu_custom_call.1} parent=5 // pred_fallthru
      _
  $region6: #{tpu_custom_call.1} parent=0 // loop_footer
    %s12 = sadd.s32 1, %s8
  $region7: #{tpu_custom_call.1} parent=0 // loop_footer_branch
    %7 = sbr.rel target = $region3
  $region8: #{tpu_custom_call.1} parent=0 // loop_exit
    _

</llo_original>
